<compile_context>
chip_gen: v5e
topology: v5e:2x2
jax: 0.10.0
libtpu: 0.0.40
codegen_flags: <defaults>
</compile_context>

<pallas_src>
import math
import functools

import jax
import jax.numpy as jnp
from jax.experimental import pallas as pl
from jax.experimental.pallas import tpu as pltpu


def _mha_kernel(enc_ref, mask_ref, wq_ref, wk_ref, wv_ref, wo_ref,
                gamma_ref, beta_ref, out_ref, attn_ref, acc_ref,
                *, eps, matmul_dtype):
    h = pl.program_id(1)
    nh = pl.num_programs(1)

    x = enc_ref[0]                      # (S, H)  residual / projection input
    mask = mask_ref[0, 0]               # (S, S)

    wq = wq_ref[0]                      # (H, Dh)  -- 1/sqrt(H) already folded in
    wk = wk_ref[0]                      # (H, Dh)
    wv = wv_ref[0]                      # (H, Dh)
    wo = wo_ref[0]                      # (Dh, H)

    x_mm = x.astype(matmul_dtype)

    # Per-head projections on the MXU (f32 accumulation).
    qh = jnp.dot(x_mm, wq, preferred_element_type=jnp.float32)   # (S, Dh), scaled
    kh = jnp.dot(x_mm, wk, preferred_element_type=jnp.float32)   # (S, Dh)
    vh = jnp.dot(x_mm, wv, preferred_element_type=jnp.float32)   # (S, Dh)

    # scores = qh @ kh^T expressed as a contraction (no materialized transpose).
    scores = jax.lax.dot_general(
        qh, kh, dimension_numbers=(((1,), (1,)), ((), ())),
        preferred_element_type=jnp.float32)                      # (S, S)

    scores = jnp.where(mask == 0, jnp.float32(-1e9), scores)

    # Numerically-stable softmax; divide replaced by (S,1) reciprocal + multiply.
    m = jnp.max(scores, axis=-1, keepdims=True)
    e = jnp.exp(scores - m)
    denom = jnp.sum(e, axis=-1, keepdims=True)
    inv = pl.reciprocal(denom)                                   # exact 1/denom
    p = e * inv                                                  # (S, S)

    attn_ref[0, 0] = p.astype(attn_ref.dtype)

    oh = jnp.dot(p.astype(matmul_dtype), vh.astype(matmul_dtype),
                 preferred_element_type=jnp.float32)             # (S, Dh)

    # Partial output projection for this head; heads accumulate into scratch.
    proj_h = jnp.dot(oh.astype(matmul_dtype), wo,
                     preferred_element_type=jnp.float32)         # (S, H)

    @pl.when(h == 0)
    def _():
        acc_ref[...] = proj_h

    @pl.when(h != 0)
    def _():
        acc_ref[...] += proj_h

    # Finalize: residual add + LayerNorm, write output once per batch block.
    @pl.when(h == nh - 1)
    def _():
        y = acc_ref[...] + x.astype(jnp.float32)
        mu = jnp.mean(y, axis=-1, keepdims=True)
        var = jnp.mean((y - mu) * (y - mu), axis=-1, keepdims=True)
        y_n = (y - mu) * jax.lax.rsqrt(var + eps)
        out_ref[0] = (y_n * gamma_ref[...] + beta_ref[...]).astype(out_ref.dtype)


def multi_head_attention(enc, mask, w_q, w_k, w_v, w_o, gamma, beta,
                         *, num_heads, eps=1e-6,
                         matmul_dtype=jnp.float32,
                         attn_dtype=jnp.float32):
    """enc: (B, S, H); mask: (B, 1, S, S); w_*: (H_out, H_in) torch-Linear layout.

    matmul_dtype: dtype of MXU operands. Use jnp.bfloat16 in production on
    v5e/v6e/v7x (2x+ MXU rate, half the weight VMEM); softmax/LayerNorm stats
    always stay f32. Demo keeps f32 to preserve tight reference tolerances.
    attn_dtype: dtype of the stored attention distributions (bf16 halves the
    dominant HBM write at real sequence lengths).
    """
    B, S, H = enc.shape
    assert H % num_heads == 0
    Dh = H // num_heads

    # Torch Linear computes x @ W^T. Fold the 1/sqrt(hidden_units) score scale
    # into W_Q (one-time O(H^2) weight transform), then split per head so each
    # grid step only DMAs its own (H, Dh) / (Dh, H) slice.
    scale = 1.0 / math.sqrt(float(H))
    wq_h = (w_q.T * scale).reshape(H, num_heads, Dh).transpose(1, 0, 2)  # (nh,H,Dh)
    wk_h = w_k.T.reshape(H, num_heads, Dh).transpose(1, 0, 2)            # (nh,H,Dh)
    wv_h = w_v.T.reshape(H, num_heads, Dh).transpose(1, 0, 2)            # (nh,H,Dh)
    wo_h = w_o.T.reshape(num_heads, Dh, H)                               # (nh,Dh,H)

    wq_h = wq_h.astype(matmul_dtype)
    wk_h = wk_h.astype(matmul_dtype)
    wv_h = wv_h.astype(matmul_dtype)
    wo_h = wo_h.astype(matmul_dtype)

    gamma2 = gamma.reshape(1, H)       # lane-aligned 2-D blocks
    beta2 = beta.reshape(1, H)

    kernel = functools.partial(_mha_kernel, eps=eps, matmul_dtype=matmul_dtype)

    out_shapes = (
        jax.ShapeDtypeStruct((B, S, H), enc.dtype),
        jax.ShapeDtypeStruct((B, num_heads, S, S), attn_dtype),
    )

    grid_spec = pltpu.PrefetchScalarGridSpec(
        num_scalar_prefetch=0,
        grid=(B, num_heads),                                   # head axis last (reduction)
        in_specs=[
            pl.BlockSpec((1, S, H), lambda b, h: (b, 0, 0)),         # enc (reused over h)
            pl.BlockSpec((1, 1, S, S), lambda b, h: (b, 0, 0, 0)),   # mask (reused over h)
            pl.BlockSpec((1, H, Dh), lambda b, h: (h, 0, 0)),        # W_Q^T head slice (scaled)
            pl.BlockSpec((1, H, Dh), lambda b, h: (h, 0, 0)),        # W_K^T head slice
            pl.BlockSpec((1, H, Dh), lambda b, h: (h, 0, 0)),        # W_V^T head slice
            pl.BlockSpec((1, Dh, H), lambda b, h: (h, 0, 0)),        # W_O^T head slice
            pl.BlockSpec((1, H), lambda b, h: (0, 0)),               # gamma
            pl.BlockSpec((1, H), lambda b, h: (0, 0)),               # beta
        ],
        out_specs=[
            pl.BlockSpec((1, S, H), lambda b, h: (b, 0, 0)),         # out: resident across h
            pl.BlockSpec((1, 1, S, S), lambda b, h: (b, h, 0, 0)),   # attn dist per (b, h)
        ],
        scratch_shapes=[pltpu.VMEM((S, H), jnp.float32)],            # head-sum accumulator
    )

    # Per-step VMEM estimate (double-buffered blocks + scratch); only raise the
    # scoped limit if the default would be too small (keeps v7x's 64 MiB safe).
    itemsize = jnp.dtype(matmul_dtype).itemsize
    blk_bytes = (2 * (4 * S * H + 4 * 4 * S * S)               # enc + mask + out + attn (f32)
                 + 2 * itemsize * (3 * H * Dh + Dh * H)        # per-head weights
                 + 4 * S * H)                                  # scratch
    vmem_limit = None
    if blk_bytes > 16 * 1024 * 1024:
        vmem_limit = min(int(blk_bytes * 3 // 2), 60 * 1024 * 1024)

    return pl.pallas_call(
        kernel,
        out_shape=out_shapes,
        grid_spec=grid_spec,
        compiler_params=pltpu.CompilerParams(
            dimension_semantics=("parallel", "arbitrary"),
            vmem_limit_bytes=vmem_limit),
    )(enc, mask, wq_h, wk_h, wv_h, wo_h, gamma2, beta2)


def _reference(enc, mask, w_q, w_k, w_v, w_o, gamma, beta, num_heads, eps=1e-6):
    """Pure-JAX reference mirroring the PyTorch forward (eval mode)."""
    B, S, H = enc.shape
    Dh = H // num_heads
    Q = enc @ w_q.T
    K = enc @ w_k.T
    V = enc @ w_v.T
    Q = Q.reshape(B, S, num_heads, Dh).transpose(0, 2, 1, 3)
    K = K.reshape(B, S, num_heads, Dh).transpose(0, 2, 1, 3)
    V = V.reshape(B, S, num_heads, Dh).transpose(0, 2, 1, 3)
    scores = jnp.einsum("bhqd,bhkd->bhqk", Q, K) / math.sqrt(H)
    scores = jnp.where(mask == 0, -1e9, scores)
    p = jax.nn.softmax(scores, axis=-1)
    out = jnp.einsum("bhqk,bhkd->bhqd", p, V)
    out = out.transpose(0, 2, 1, 3).reshape(B, S, H)
    y = out @ w_o.T + enc
    mu = jnp.mean(y, axis=-1, keepdims=True)
    var = jnp.mean((y - mu) ** 2, axis=-1, keepdims=True)
    y = (y - mu) / jnp.sqrt(var + eps) * gamma + beta
    return y, p


if __name__ == "__main__":
    B, S, H = 2, 8, 32
    num_heads = 2

    key = jax.random.PRNGKey(0)
    k_enc, k_q, k_k, k_v, k_o = jax.random.split(key, 5)

    enc = jax.random.normal(k_enc, (B, S, H), dtype=jnp.float32)

    # Deterministic "Linear" weights (torch layout: (out_features, in_features)).
    bound = 1.0 / math.sqrt(H)
    w_q = jax.random.uniform(k_q, (H, H), jnp.float32, -bound, bound)
    w_k = jax.random.uniform(k_k, (H, H), jnp.float32, -bound, bound)
    w_v = jax.random.uniform(k_v, (H, H), jnp.float32, -bound, bound)
    w_o = jax.random.uniform(k_o, (H, H), jnp.float32, -bound, bound)

    # LayerNorm params (PyTorch default init).
    gamma = jnp.ones((H,), jnp.float32)
    beta = jnp.zeros((H,), jnp.float32)

    # Causal mask (B, 1, S, S): 1 where attention is allowed, 0 where masked.
    mask = jnp.tril(jnp.ones((S, S), jnp.float32))[None, None, :, :]
    mask = jnp.broadcast_to(mask, (B, 1, S, S))

    out, attn_dist = multi_head_attention(
        enc, mask, w_q, w_k, w_v, w_o, gamma, beta, num_heads=num_heads)
    out = jax.block_until_ready(out)
    attn_dist = jax.block_until_ready(attn_dist)

    ref_out, ref_attn = _reference(enc, mask, w_q, w_k, w_v, w_o, gamma, beta,
                                   num_heads)
    assert jnp.allclose(out, ref_out, atol=1e-4, rtol=1e-4), "output mismatch"
    assert jnp.allclose(attn_dist, ref_attn, atol=1e-5, rtol=1e-5), "attn mismatch"

    print("KERNEL_OK")
</pallas_src>

<mosaic_0001>
module attributes {stable_mosaic.version = 11 : i64} {
  func.func @_mha_kernel(%arg0: i32, %arg1: i32, %arg2: memref<1x8x32xf32, #tpu.memory_space<vmem>>, %arg3: memref<1x1x8x8xf32, #tpu.memory_space<vmem>>, %arg4: memref<1x32x16xf32, #tpu.memory_space<vmem>>, %arg5: memref<1x32x16xf32, #tpu.memory_space<vmem>>, %arg6: memref<1x32x16xf32, #tpu.memory_space<vmem>>, %arg7: memref<1x16x32xf32, #tpu.memory_space<vmem>>, %arg8: memref<1x32xf32, #tpu.memory_space<vmem>>, %arg9: memref<1x32xf32, #tpu.memory_space<vmem>>, %arg10: memref<1x8x32xf32, #tpu.memory_space<vmem>>, %arg11: memref<1x1x8x8xf32, #tpu.memory_space<vmem>>, %arg12: memref<8x32xf32, #tpu.memory_space<vmem>>) attributes {dimension_semantics = [#tpu.dimension_semantics<parallel>, #tpu.dimension_semantics<arbitrary>], iteration_bounds = array<i64: 2, 2>, scalar_prefetch = 0 : i64, scratch_operands = 1 : i64, tpu.core_type = #tpu.core_type<tc>, window_params = [{transform_indices = @transform_0, window_bounds = array<i64: 1, 8, 32>}, {transform_indices = @transform_1, window_bounds = array<i64: 1, 1, 8, 8>}, {transform_indices = @transform_2, window_bounds = array<i64: 1, 32, 16>}, {transform_indices = @transform_3, window_bounds = array<i64: 1, 32, 16>}, {transform_indices = @transform_4, window_bounds = array<i64: 1, 32, 16>}, {transform_indices = @transform_5, window_bounds = array<i64: 1, 16, 32>}, {pipeline_mode = #tpu.pipeline_mode<synchronous>, transform_indices = @transform_6, window_bounds = array<i64: 1, 32>}, {pipeline_mode = #tpu.pipeline_mode<synchronous>, transform_indices = @transform_7, window_bounds = array<i64: 1, 32>}, {transform_indices = @transform_8, window_bounds = array<i64: 1, 8, 32>}, {transform_indices = @transform_9, window_bounds = array<i64: 1, 1, 8, 8>}]} {
    %c0 = arith.constant 0 : index
    %c0_0 = arith.constant 0 : index
    %c0_1 = arith.constant 0 : index
    %0 = vector.load %arg2[%c0, %c0_0, %c0_1] : memref<1x8x32xf32, #tpu.memory_space<vmem>>, vector<1x8x32xf32>
    %1 = vector.shape_cast %0 : vector<1x8x32xf32> to vector<8x32xf32>
    %c0_2 = arith.constant 0 : index
    %c0_3 = arith.constant 0 : index
    %c0_4 = arith.constant 0 : index
    %c0_5 = arith.constant 0 : index
    %2 = vector.load %arg3[%c0_2, %c0_3, %c0_4, %c0_5] : memref<1x1x8x8xf32, #tpu.memory_space<vmem>>, vector<1x1x8x8xf32>
    %3 = vector.shape_cast %2 : vector<1x1x8x8xf32> to vector<8x8xf32>
    %c0_6 = arith.constant 0 : index
    %c0_7 = arith.constant 0 : index
    %c0_8 = arith.constant 0 : index
    %4 = vector.load %arg4[%c0_6, %c0_7, %c0_8] : memref<1x32x16xf32, #tpu.memory_space<vmem>>, vector<1x32x16xf32>
    %5 = vector.shape_cast %4 : vector<1x32x16xf32> to vector<32x16xf32>
    %c0_9 = arith.constant 0 : index
    %c0_10 = arith.constant 0 : index
    %c0_11 = arith.constant 0 : index
    %6 = vector.load %arg5[%c0_9, %c0_10, %c0_11] : memref<1x32x16xf32, #tpu.memory_space<vmem>>, vector<1x32x16xf32>
    %7 = vector.shape_cast %6 : vector<1x32x16xf32> to vector<32x16xf32>
    %c0_12 = arith.constant 0 : index
    %c0_13 = arith.constant 0 : index
    %c0_14 = arith.constant 0 : index
    %8 = vector.load %arg6[%c0_12, %c0_13, %c0_14] : memref<1x32x16xf32, #tpu.memory_space<vmem>>, vector<1x32x16xf32>
    %9 = vector.shape_cast %8 : vector<1x32x16xf32> to vector<32x16xf32>
    %c0_15 = arith.constant 0 : index
    %c0_16 = arith.constant 0 : index
    %c0_17 = arith.constant 0 : index
    %10 = vector.load %arg7[%c0_15, %c0_16, %c0_17] : memref<1x16x32xf32, #tpu.memory_space<vmem>>, vector<1x16x32xf32>
    %11 = vector.shape_cast %10 : vector<1x16x32xf32> to vector<16x32xf32>
    %cst = arith.constant dense<0.000000e+00> : vector<8x16xf32>
    %12 = tpu.matmul %1, %5, %cst {dimension_numbers = #tpu.dot_dimension_numbers<[1], [0], [0], [1], [0, 0, 1, 1], [], []>} : vector<8x32xf32>, vector<32x16xf32>, vector<8x16xf32> -> vector<8x16xf32>
    %cst_18 = arith.constant dense<0.000000e+00> : vector<8x16xf32>
    %13 = tpu.matmul %1, %7, %cst_18 {dimension_numbers = #tpu.dot_dimension_numbers<[1], [0], [0], [1], [0, 0, 1, 1], [], []>} : vector<8x32xf32>, vector<32x16xf32>, vector<8x16xf32> -> vector<8x16xf32>
    %cst_19 = arith.constant dense<0.000000e+00> : vector<8x16xf32>
    %14 = tpu.matmul %1, %9, %cst_19 {dimension_numbers = #tpu.dot_dimension_numbers<[1], [0], [0], [1], [0, 0, 1, 1], [], []>} : vector<8x32xf32>, vector<32x16xf32>, vector<8x16xf32> -> vector<8x16xf32>
    %cst_20 = arith.constant dense<0.000000e+00> : vector<8x8xf32>
    %15 = tpu.matmul %12, %13, %cst_20 {dimension_numbers = #tpu.dot_dimension_numbers<[1], [1], [0], [0], [0, 0, 1, 0], [], []>} : vector<8x16xf32>, vector<8x16xf32>, vector<8x8xf32> -> vector<8x8xf32>
    %cst_21 = arith.constant 0.000000e+00 : f32
    %16 = vector.broadcast %cst_21 : f32 to vector<8x8xf32>
    %17 = arith.cmpf oeq, %3, %16 : vector<8x8xf32>
    %cst_22 = arith.constant -1.000000e+09 : f32
    %18 = vector.broadcast %cst_22 : f32 to vector<8x8xf32>
    %19 = arith.select %17, %18, %15 : vector<8x8xi1>, vector<8x8xf32>
    %cst_23 = arith.constant dense<0xFF800000> : vector<8xf32>
    %20 = vector.multi_reduction <maximumf>, %19, %cst_23 [1] : vector<8x8xf32> to vector<8xf32>
    %21 = vector.shape_cast %20 : vector<8xf32> to vector<8x1xf32>
    %22 = vector.broadcast %21 : vector<8x1xf32> to vector<8x8xf32>
    %23 = arith.subf %19, %22 : vector<8x8xf32>
    %24 = math.exp %23 : vector<8x8xf32>
    %cst_24 = arith.constant dense<0.000000e+00> : vector<8xf32>
    %25 = vector.multi_reduction <add>, %24, %cst_24 [1] : vector<8x8xf32> to vector<8xf32>
    %26 = vector.shape_cast %25 : vector<8xf32> to vector<8x1xf32>
    %27 = tpu.reciprocal %26 : vector<8x1xf32> -> vector<8x1xf32>
    %28 = vector.broadcast %27 : vector<8x1xf32> to vector<8x8xf32>
    %29 = arith.mulf %24, %28 : vector<8x8xf32>
    %c0_25 = arith.constant 0 : index
    %c0_26 = arith.constant 0 : index
    %c0_27 = arith.constant 0 : index
    %c0_28 = arith.constant 0 : index
    %30 = vector.load %arg11[%c0_25, %c0_26, %c0_27, %c0_28] : memref<1x1x8x8xf32, #tpu.memory_space<vmem>>, vector<1x1x8x8xf32>
    %31 = vector.shape_cast %30 : vector<1x1x8x8xf32> to vector<8x8xf32>
    %32 = vector.shape_cast %29 : vector<8x8xf32> to vector<1x1x8x8xf32>
    tpu.vector_store %arg11[%c0_25, %c0_26, %c0_27, %c0_28], %32 {strides = array<i32>} : memref<1x1x8x8xf32, #tpu.memory_space<vmem>>, vector<1x1x8x8xf32>,
    %cst_29 = arith.constant dense<0.000000e+00> : vector<8x16xf32>
    %33 = tpu.matmul %29, %14, %cst_29 {dimension_numbers = #tpu.dot_dimension_numbers<[1], [0], [0], [1], [0, 0, 1, 1], [], []>} : vector<8x8xf32>, vector<8x16xf32>, vector<8x16xf32> -> vector<8x16xf32>
    %cst_30 = arith.constant dense<0.000000e+00> : vector<8x32xf32>
    %34 = tpu.matmul %33, %11, %cst_30 {dimension_numbers = #tpu.dot_dimension_numbers<[1], [0], [0], [1], [0, 0, 1, 1], [], []>} : vector<8x16xf32>, vector<16x32xf32>, vector<8x32xf32> -> vector<8x32xf32>
    %c0_i32 = arith.constant 0 : i32
    %35 = arith.cmpi eq, %arg1, %c0_i32 : i32
    %36 = arith.extui %35 : i1 to i32
    %c0_i32_31 = arith.constant 0 : i32
    %37 = arith.cmpi ne, %36, %c0_i32_31 : i32
    scf.if %37 {
      %c0_35 = arith.constant 0 : index
      %c0_36 = arith.constant 0 : index
      %44 = vector.load %arg12[%c0_35, %c0_36] : memref<8x32xf32, #tpu.memory_space<vmem>>, vector<8x32xf32>
      tpu.vector_store %arg12[%c0_35, %c0_36], %34 {strides = array<i32>} : memref<8x32xf32, #tpu.memory_space<vmem>>, vector<8x32xf32>,
    } else {
    }
    %c0_i32_32 = arith.constant 0 : i32
    %38 = arith.cmpi ne, %arg1, %c0_i32_32 : i32
    %39 = arith.extui %38 : i1 to i32
    %c0_i32_33 = arith.constant 0 : i32
    %40 = arith.cmpi ne, %39, %c0_i32_33 : i32
    scf.if %40 {
      %c0_35 = arith.constant 0 : index
      %c0_36 = arith.constant 0 : index
      %44 = vector.load %arg12[%c0_35, %c0_36] : memref<8x32xf32, #tpu.memory_space<vmem>>, vector<8x32xf32>
      %45 = arith.addf %44, %34 : vector<8x32xf32>
      %c0_37 = arith.constant 0 : index
      %c0_38 = arith.constant 0 : index
      %46 = vector.load %arg12[%c0_37, %c0_38] : memref<8x32xf32, #tpu.memory_space<vmem>>, vector<8x32xf32>
      tpu.vector_store %arg12[%c0_37, %c0_38], %45 {strides = array<i32>} : memref<8x32xf32, #tpu.memory_space<vmem>>, vector<8x32xf32>,
    } else {
    }
    %c1_i32 = arith.constant 1 : i32
    %41 = arith.cmpi eq, %arg1, %c1_i32 : i32
    %42 = arith.extui %41 : i1 to i32
    %c0_i32_34 = arith.constant 0 : i32
    %43 = arith.cmpi ne, %42, %c0_i32_34 : i32
    scf.if %43 {
      %c0_35 = arith.constant 0 : index
      %c0_36 = arith.constant 0 : index
      %44 = vector.load %arg12[%c0_35, %c0_36] : memref<8x32xf32, #tpu.memory_space<vmem>>, vector<8x32xf32>
      %45 = arith.addf %44, %1 : vector<8x32xf32>
      %cst_37 = arith.constant dense<0.000000e+00> : vector<8xf32>
      %46 = vector.multi_reduction <add>, %45, %cst_37 [1] : vector<8x32xf32> to vector<8xf32>
      %47 = vector.shape_cast %46 : vector<8xf32> to vector<8x1xf32>
      %cst_38 = arith.constant 3.200000e+01 : f32
      %48 = vector.broadcast %cst_38 : f32 to vector<8x1xf32>
      %49 = arith.divf %47, %48 : vector<8x1xf32>
      %50 = vector.broadcast %49 : vector<8x1xf32> to vector<8x32xf32>
      %51 = arith.subf %45, %50 : vector<8x32xf32>
      %52 = vector.broadcast %49 : vector<8x1xf32> to vector<8x32xf32>
      %53 = arith.subf %45, %52 : vector<8x32xf32>
      %54 = arith.mulf %51, %53 : vector<8x32xf32>
      %cst_39 = arith.constant dense<0.000000e+00> : vector<8xf32>
      %55 = vector.multi_reduction <add>, %54, %cst_39 [1] : vector<8x32xf32> to vector<8xf32>
      %56 = vector.shape_cast %55 : vector<8xf32> to vector<8x1xf32>
      %cst_40 = arith.constant 3.200000e+01 : f32
      %57 = vector.broadcast %cst_40 : f32 to vector<8x1xf32>
      %58 = arith.divf %56, %57 : vector<8x1xf32>
      %59 = vector.broadcast %49 : vector<8x1xf32> to vector<8x32xf32>
      %60 = arith.subf %45, %59 : vector<8x32xf32>
      %cst_41 = arith.constant 9.99999997E-7 : f32
      %61 = vector.broadcast %cst_41 : f32 to vector<8x1xf32>
      %62 = arith.addf %58, %61 : vector<8x1xf32>
      %63 = math.rsqrt %62 : vector<8x1xf32>
      %64 = vector.broadcast %63 : vector<8x1xf32> to vector<8x32xf32>
      %65 = arith.mulf %60, %64 : vector<8x32xf32>
      %c0_42 = arith.constant 0 : index
      %c0_43 = arith.constant 0 : index
      %66 = vector.load %arg8[%c0_42, %c0_43] : memref<1x32xf32, #tpu.memory_space<vmem>>, vector<1x32xf32>
      %67 = vector.broadcast %66 : vector<1x32xf32> to vector<8x32xf32>
      %68 = arith.mulf %65, %67 : vector<8x32xf32>
      %c0_44 = arith.constant 0 : index
      %c0_45 = arith.constant 0 : index
      %69 = vector.load %arg9[%c0_44, %c0_45] : memref<1x32xf32, #tpu.memory_space<vmem>>, vector<1x32xf32>
      %70 = vector.broadcast %69 : vector<1x32xf32> to vector<8x32xf32>
      %71 = arith.addf %68, %70 : vector<8x32xf32>
      %c0_46 = arith.constant 0 : index
      %c0_47 = arith.constant 0 : index
      %c0_48 = arith.constant 0 : index
      %72 = vector.load %arg10[%c0_46, %c0_47, %c0_48] : memref<1x8x32xf32, #tpu.memory_space<vmem>>, vector<1x8x32xf32>
      %73 = vector.shape_cast %72 : vector<1x8x32xf32> to vector<8x32xf32>
      %74 = vector.shape_cast %71 : vector<8x32xf32> to vector<1x8x32xf32>
      tpu.vector_store %arg10[%c0_46, %c0_47, %c0_48], %74 {strides = array<i32>} : memref<1x8x32xf32, #tpu.memory_space<vmem>>, vector<1x8x32xf32>,
    } else {
    }
    return
  }
  func.func @transform_0(%arg0: i32, %arg1: i32) -> (i32, i32, i32) {
    %c0_i32 = arith.constant 0 : i32
    %c0_i32_0 = arith.constant 0 : i32
    %c0_i32_1 = arith.constant 0 : i32
    return %arg0, %c0_i32, %c0_i32_0 : i32, i32, i32
  }
  func.func @transform_1(%arg0: i32, %arg1: i32) -> (i32, i32, i32, i32) {
    %c0_i32 = arith.constant 0 : i32
    %c0_i32_0 = arith.constant 0 : i32
    %c0_i32_1 = arith.constant 0 : i32
    %c0_i32_2 = arith.constant 0 : i32
    return %arg0, %c0_i32, %c0_i32_0, %c0_i32_1 : i32, i32, i32, i32
  }
  func.func @transform_2(%arg0: i32, %arg1: i32) -> (i32, i32, i32) {
    %c0_i32 = arith.constant 0 : i32
    %c0_i32_0 = arith.constant 0 : i32
    %c0_i32_1 = arith.constant 0 : i32
    return %arg1, %c0_i32, %c0_i32_0 : i32, i32, i32
  }
  func.func @transform_3(%arg0: i32, %arg1: i32) -> (i32, i32, i32) {
    %c0_i32 = arith.constant 0 : i32
    %c0_i32_0 = arith.constant 0 : i32
    %c0_i32_1 = arith.constant 0 : i32
    return %arg1, %c0_i32, %c0_i32_0 : i32, i32, i32
  }
  func.func @transform_4(%arg0: i32, %arg1: i32) -> (i32, i32, i32) {
    %c0_i32 = arith.constant 0 : i32
    %c0_i32_0 = arith.constant 0 : i32
    %c0_i32_1 = arith.constant 0 : i32
    return %arg1, %c0_i32, %c0_i32_0 : i32, i32, i32
  }
  func.func @transform_5(%arg0: i32, %arg1: i32) -> (i32, i32, i32) {
    %c0_i32 = arith.constant 0 : i32
    %c0_i32_0 = arith.constant 0 : i32
    %c0_i32_1 = arith.constant 0 : i32
    return %arg1, %c0_i32, %c0_i32_0 : i32, i32, i32
  }
  func.func @transform_6(%arg0: i32, %arg1: i32) -> (i32, i32) {
    %c0_i32 = arith.constant 0 : i32
    %c0_i32_0 = arith.constant 0 : i32
    %c0_i32_1 = arith.constant 0 : i32
    return %c0_i32, %c0_i32_0 : i32, i32
  }
  func.func @transform_7(%arg0: i32, %arg1: i32) -> (i32, i32) {
    %c0_i32 = arith.constant 0 : i32
    %c0_i32_0 = arith.constant 0 : i32
    %c0_i32_1 = arith.constant 0 : i32
    return %c0_i32, %c0_i32_0 : i32, i32
  }
  func.func @transform_8(%arg0: i32, %arg1: i32) -> (i32, i32, i32) {
    %c0_i32 = arith.constant 0 : i32
    %c0_i32_0 = arith.constant 0 : i32
    %c0_i32_1 = arith.constant 0 : i32
    return %arg0, %c0_i32, %c0_i32_0 : i32, i32, i32
  }
  func.func @transform_9(%arg0: i32, %arg1: i32) -> (i32, i32, i32, i32) {
    %c0_i32 = arith.constant 0 : i32
    %c0_i32_0 = arith.constant 0 : i32
    %c0_i32_1 = arith.constant 0 : i32
    return %arg0, %arg1, %c0_i32, %c0_i32_0 : i32, i32, i32, i32
  }
}

</mosaic_0001>

<llo_original>
// kernel: tpu_custom_call.1
$region0: #{tpu_custom_call.1}
  #allocation0 [shape = 'u32[]', space=smem, size = 0x4, offset = 0x4, fixed_abs, tag = 'smem constant byte address 0x4 - core index']
  #allocation1 [shape = 'u32[72,128]{1,0:T(1,128)}', space=vmem, size = 0x9000, scoped, tag = 'internal scratch']
  #allocation2 [shape = 'f32[8,32]{1,0:T(8,128)}', space=vmem, size = 0x1000, scoped, tag = 'scratch operand']
  %s0 = inlined_call_operand.vmem [shape: f32[2,8,32], index: 0, kind: input, shape index: {}]
  %s1 = inlined_call_operand.vmem [shape: f32[2,1,8,8], index: 1, kind: input, shape index: {}]
  %s2 = inlined_call_operand.vmem [shape: f32[2,32,16], index: 2, kind: input, shape index: {}]
  %s3 = inlined_call_operand.vmem [shape: f32[2,32,16], index: 3, kind: input, shape index: {}]
  %s4 = inlined_call_operand.vmem [shape: f32[2,32,16], index: 4, kind: input, shape index: {}]
  %s5 = inlined_call_operand.vmem [shape: f32[2,16,32], index: 5, kind: input, shape index: {}]
  %s6 = inlined_call_operand.vmem [shape: f32[1,32], index: 6, kind: input, shape index: {}]
  %s7 = inlined_call_operand.vmem [shape: f32[1,32], index: 7, kind: input, shape index: {}]
  %s8 = inlined_call_operand.hbm [shape: f32[2,8,32], index: 8, kind: output, shape index: {0}]
  %s9 = inlined_call_operand.hbm [shape: f32[2,2,8,8], index: 9, kind: output, shape index: {1}]
  %10 = xla_tuple %s8, %s9
  %s11 = sld [smem:[#allocation0]]
  $region85: #{tpu_custom_call.1} parent=0
    _
  %s13 = ssub.s32 1, %s11
  %s14 = scalar_select 0, %s13, %s11
  $region1: #{tpu_custom_call.1} parent=0
    #allocation3 [shape = 'u8[8192]{0}', space=vmem, size = 0x2000, scoped, tag = 'output window, operand 0']
    #allocation4 [shape = 's32[2]{0}', space=sflag, size = 0x8, scoped, tag = 'scoped memory for tpu_custom_call.1']
    #allocation5 [shape = 'u8[8192]{0}', space=vmem, size = 0x2000, scoped, tag = 'output window, operand 1']
    #allocation6 [shape = 's32[2]{0}', space=sflag, size = 0x8, scoped, tag = 'scoped memory for tpu_custom_call.1']
    %15 = vsyncpa [#allocation4], 0
    %s16 = scalar_lea.sflag [#allocation4], 1
    %17 = vsyncpa %s16, 0
    %18 = vsyncpa [#allocation6], 0
    %s19 = scalar_lea.sflag [#allocation6], 1
    %20 = vsyncpa %s19, 0
    loop: start=0, step=1, limit=6
    $region2: #{tpu_custom_call.1} parent=1 // loop_pre_header
      _
    $region3: #{tpu_custom_call.1} parent=1 // loop_header
      %s22 = sphi 0, %s26
      %p23 = scmp.ge.s32.totalorder %s22, 6
      %s29 = sphi 0, %s41
      %s30 = sphi 0, %s37
      %s31 = sphi 0, %s29
      %s32 = sphi 0, %s30
      %s33 = sphi 0, %s31
      %s34 = sphi 0, %s32
      %s44 = sphi 0, %s46
      %s47 = sphi 0, %s44
      %s48 = sphi 0, %s47
      %s64 = sphi 0, %s48
      %s70 = sphi 0, %s72
      %s73 = sphi 0, %s70
      %s74 = sphi 0, %s73
      %s90 = sphi 0, %s74
      %s96 = sphi 0, %s98
      %s99 = sphi 0, %s96
      %s100 = sphi 0, %s99
      %s116 = sphi 0, %s100
      %s122 = sphi 0, %s124
      %s125 = sphi 0, %s122
      %s126 = sphi 0, %s125
      %s142 = sphi 0, %s126
      %s148 = sphi 0, %s150
      %s151 = sphi 0, %s148
      %s152 = sphi 0, %s151
      %s168 = sphi 0, %s152
      %s174 = sphi 0, %s176
      %s177 = sphi 0, %s174
      %s178 = sphi 0, %s177
      %s194 = sphi 0, %s178
      %s198 = sphi 0, %s198
      %s200 = sphi 0, %s198
      %s201 = sphi 0, %s200
      %s215 = sphi 0, %s201
      %s219 = sphi 0, %s219
      %s221 = sphi 0, %s219
      %s222 = sphi 0, %s221
      %s236 = sphi 0, %s222
      %s242 = sphi 0, %s244
      %s245 = sphi 0, %s242
      %s246 = sphi 0, %s245
      %s262 = sphi 0, %s246
      %s270 = sphi 0, %s272
      %s273 = sphi 0, %s270
      %s274 = sphi 0, %s273
      %s290 = sphi 0, %s274
    $region4: #{tpu_custom_call.1} parent=1 // loop_header_branch
      %25 = sbr.rel (%p23) target = $region8
    $region5: #{tpu_custom_call.1} parent=1 // loop_body
      %s27 = ssub.s32 %s22, 1
      %s28 = ssub.s32 %s22, 2
      %s35 = sadd.s32 1, %s30
      %p36 = scmp.ge.s32.totalorder %s35, 2
      %s37 = scalar_select %p36, 0, %s35
      %s38 = sadd.s32 1, %s29
      %s39 = scalar_select %p36, %s38, %s29
      %p40 = scmp.ge.s32.totalorder %s39, 2
      %s41 = scalar_select %p40, 0, %s39
      %s42 = ssub.s32 %s29, %s41
      %p43 = scmp.eq.s32.totalorder %s42, 0
      %s45 = sadd.s32 %s44, 1
      %s46 = scalar_select %p43, %s44, %s45
      %p49 = pneg %p43
      %p50 = scmp.eq.s32.totalorder %s22, 3
      %p51 = por %p49, %p50
      %p52 = scmp.ne.s32.totalorder %s44, %s47
      %p53 = scmp.eq.s32.totalorder %s22, 0
      %p54 = por %p52, %p53
      %p55 = scmp.ne.s32.totalorder %s44, %s47
      %p56 = scmp.eq.s32.totalorder %s27, 3
      %p57 = por %p55, %p56
      %p58 = scmp.ne.s32.totalorder %s47, %s48
      %p59 = scmp.eq.s32.totalorder %s27, 0
      %p60 = por %p58, %p59
      %p61 = scmp.ne.s32.totalorder %s47, %s48
      %p62 = scmp.eq.s32.totalorder %s28, 3
      %p63 = por %p61, %p62
      %p65 = scmp.ne.s32.totalorder %s48, %s64
      %p66 = scmp.eq.s32.totalorder %s28, 0
      %p67 = por %p65, %p66
      %s68 = ssub.s32 %s29, %s41
      %p69 = scmp.eq.s32.totalorder %s68, 0
      %s71 = sadd.s32 %s70, 1
      %s72 = scalar_select %p69, %s70, %s71
      %p75 = pneg %p69
      %p76 = scmp.eq.s32.totalorder %s22, 3
      %p77 = por %p75, %p76
      %p78 = scmp.ne.s32.totalorder %s70, %s73
      %p79 = scmp.eq.s32.totalorder %s22, 0
      %p80 = por %p78, %p79
      %p81 = scmp.ne.s32.totalorder %s70, %s73
      %p82 = scmp.eq.s32.totalorder %s27, 3
      %p83 = por %p81, %p82
      %p84 = scmp.ne.s32.totalorder %s73, %s74
      %p85 = scmp.eq.s32.totalorder %s27, 0
      %p86 = por %p84, %p85
      %p87 = scmp.ne.s32.totalorder %s73, %s74
      %p88 = scmp.eq.s32.totalorder %s28, 3
      %p89 = por %p87, %p88
      %p91 = scmp.ne.s32.totalorder %s74, %s90
      %p92 = scmp.eq.s32.totalorder %s28, 0
      %p93 = por %p91, %p92
      %s94 = ssub.s32 %s30, %s37
      %p95 = scmp.eq.s32.totalorder %s94, 0
      %s97 = sadd.s32 %s96, 1
      %s98 = scalar_select %p95, %s96, %s97
      %p101 = pneg %p95
      %p102 = scmp.eq.s32.totalorder %s22, 3
      %p103 = por %p101, %p102
      %p104 = scmp.ne.s32.totalorder %s96, %s99
      %p105 = scmp.eq.s32.totalorder %s22, 0
      %p106 = por %p104, %p105
      %p107 = scmp.ne.s32.totalorder %s96, %s99
      %p108 = scmp.eq.s32.totalorder %s27, 3
      %p109 = por %p107, %p108
      %p110 = scmp.ne.s32.totalorder %s99, %s100
      %p111 = scmp.eq.s32.totalorder %s27, 0
      %p112 = por %p110, %p111
      %p113 = scmp.ne.s32.totalorder %s99, %s100
      %p114 = scmp.eq.s32.totalorder %s28, 3
      %p115 = por %p113, %p114
      %p117 = scmp.ne.s32.totalorder %s100, %s116
      %p118 = scmp.eq.s32.totalorder %s28, 0
      %p119 = por %p117, %p118
      %s120 = ssub.s32 %s30, %s37
      %p121 = scmp.eq.s32.totalorder %s120, 0
      %s123 = sadd.s32 %s122, 1
      %s124 = scalar_select %p121, %s122, %s123
      %p127 = pneg %p121
      %p128 = scmp.eq.s32.totalorder %s22, 3
      %p129 = por %p127, %p128
      %p130 = scmp.ne.s32.totalorder %s122, %s125
      %p131 = scmp.eq.s32.totalorder %s22, 0
      %p132 = por %p130, %p131
      %p133 = scmp.ne.s32.totalorder %s122, %s125
      %p134 = scmp.eq.s32.totalorder %s27, 3
      %p135 = por %p133, %p134
      %p136 = scmp.ne.s32.totalorder %s125, %s126
      %p137 = scmp.eq.s32.totalorder %s27, 0
      %p138 = por %p136, %p137
      %p139 = scmp.ne.s32.totalorder %s125, %s126
      %p140 = scmp.eq.s32.totalorder %s28, 3
      %p141 = por %p139, %p140
      %p143 = scmp.ne.s32.totalorder %s126, %s142
      %p144 = scmp.eq.s32.totalorder %s28, 0
      %p145 = por %p143, %p144
      %s146 = ssub.s32 %s30, %s37
      %p147 = scmp.eq.s32.totalorder %s146, 0
      %s149 = sadd.s32 %s148, 1
      %s150 = scalar_select %p147, %s148, %s149
      %p153 = pneg %p147
      %p154 = scmp.eq.s32.totalorder %s22, 3
      %p155 = por %p153, %p154
      %p156 = scmp.ne.s32.totalorder %s148, %s151
      %p157 = scmp.eq.s32.totalorder %s22, 0
      %p158 = por %p156, %p157
      %p159 = scmp.ne.s32.totalorder %s148, %s151
      %p160 = scmp.eq.s32.totalorder %s27, 3
      %p161 = por %p159, %p160
      %p162 = scmp.ne.s32.totalorder %s151, %s152
      %p163 = scmp.eq.s32.totalorder %s27, 0
      %p164 = por %p162, %p163
      %p165 = scmp.ne.s32.totalorder %s151, %s152
      %p166 = scmp.eq.s32.totalorder %s28, 3
      %p167 = por %p165, %p166
      %p169 = scmp.ne.s32.totalorder %s152, %s168
      %p170 = scmp.eq.s32.totalorder %s28, 0
      %p171 = por %p169, %p170
      %s172 = ssub.s32 %s30, %s37
      %p173 = scmp.eq.s32.totalorder %s172, 0
      %s175 = sadd.s32 %s174, 1
      %s176 = scalar_select %p173, %s174, %s175
      %p179 = pneg %p173
      %p180 = scmp.eq.s32.totalorder %s22, 3
      %p181 = por %p179, %p180
      %p182 = scmp.ne.s32.totalorder %s174, %s177
      %p183 = scmp.eq.s32.totalorder %s22, 0
      %p184 = por %p182, %p183
      %p185 = scmp.ne.s32.totalorder %s174, %s177
      %p186 = scmp.eq.s32.totalorder %s27, 3
      %p187 = por %p185, %p186
      %p188 = scmp.ne.s32.totalorder %s177, %s178
      %p189 = scmp.eq.s32.totalorder %s27, 0
      %p190 = por %p188, %p189
      %p191 = scmp.ne.s32.totalorder %s177, %s178
      %p192 = scmp.eq.s32.totalorder %s28, 3
      %p193 = por %p191, %p192
      %p195 = scmp.ne.s32.totalorder %s178, %s194
      %p196 = scmp.eq.s32.totalorder %s28, 0
      %p197 = por %p195, %p196
      %s199 = sadd.s32 %s198, 1
      %p202 = scmp.eq.s32.totalorder %s22, 3
      %p203 = scmp.ne.s32.totalorder %s198, %s200
      %p204 = scmp.eq.s32.totalorder %s22, 0
      %p205 = por %p203, %p204
      %p206 = scmp.ne.s32.totalorder %s198, %s200
      %p207 = scmp.eq.s32.totalorder %s27, 3
      %p208 = por %p206, %p207
      %p209 = scmp.ne.s32.totalorder %s200, %s201
      %p210 = scmp.eq.s32.totalorder %s27, 0
      %p211 = por %p209, %p210
      %p212 = scmp.ne.s32.totalorder %s200, %s201
      %p213 = scmp.eq.s32.totalorder %s28, 3
      %p214 = por %p212, %p213
      %p216 = scmp.ne.s32.totalorder %s201, %s215
      %p217 = scmp.eq.s32.totalorder %s28, 0
      %p218 = por %p216, %p217
      %s220 = sadd.s32 %s219, 1
      %p223 = scmp.eq.s32.totalorder %s22, 3
      %p224 = scmp.ne.s32.totalorder %s219, %s221
      %p225 = scmp.eq.s32.totalorder %s22, 0
      %p226 = por %p224, %p225
      %p227 = scmp.ne.s32.totalorder %s219, %s221
      %p228 = scmp.eq.s32.totalorder %s27, 3
      %p229 = por %p227, %p228
      %p230 = scmp.ne.s32.totalorder %s221, %s222
      %p231 = scmp.eq.s32.totalorder %s27, 0
      %p232 = por %p230, %p231
      %p233 = scmp.ne.s32.totalorder %s221, %s222
      %p234 = scmp.eq.s32.totalorder %s28, 3
      %p235 = por %p233, %p234
      %p237 = scmp.ne.s32.totalorder %s222, %s236
      %p238 = scmp.eq.s32.totalorder %s28, 0
      %p239 = por %p237, %p238
      %s240 = ssub.s32 %s29, %s41
      %p241 = scmp.eq.s32.totalorder %s240, 0
      %s243 = sadd.s32 %s242, 1
      %s244 = scalar_select %p241, %s242, %s243
      %p247 = pneg %p241
      %p248 = scmp.eq.s32.totalorder %s22, 3
      %p249 = por %p247, %p248
      %p250 = scmp.ne.s32.totalorder %s242, %s245
      %p251 = scmp.eq.s32.totalorder %s22, 0
      %p252 = por %p250, %p251
      %p253 = scmp.ne.s32.totalorder %s242, %s245
      %p254 = scmp.eq.s32.totalorder %s27, 3
      %p255 = por %p253, %p254
      %p256 = scmp.ne.s32.totalorder %s245, %s246
      %p257 = scmp.eq.s32.totalorder %s27, 0
      %p258 = por %p256, %p257
      %p259 = scmp.ne.s32.totalorder %s245, %s246
      %p260 = scmp.eq.s32.totalorder %s28, 3
      %p261 = por %p259, %p260
      %p263 = scmp.ne.s32.totalorder %s246, %s262
      %p264 = scmp.eq.s32.totalorder %s28, 0
      %p265 = por %p263, %p264
      %s266 = ssub.s32 %s29, %s41
      %s267 = ssub.s32 %s30, %s37
      %s268 = sor.u32 %s266, %s267
      %p269 = scmp.eq.s32.totalorder %s268, 0
      %s271 = sadd.s32 %s270, 1
      %s272 = scalar_select %p269, %s270, %s271
      %p275 = pneg %p269
      %p276 = scmp.eq.s32.totalorder %s22, 3
      %p277 = por %p275, %p276
      %p278 = scmp.ne.s32.totalorder %s270, %s273
      %p279 = scmp.eq.s32.totalorder %s22, 0
      %p280 = por %p278, %p279
      %p281 = scmp.ne.s32.totalorder %s270, %s273
      %p282 = scmp.eq.s32.totalorder %s27, 3
      %p283 = por %p281, %p282
      %p284 = scmp.ne.s32.totalorder %s273, %s274
      %p285 = scmp.eq.s32.totalorder %s27, 0
      %p286 = por %p284, %p285
      %p287 = scmp.ne.s32.totalorder %s273, %s274
      %p288 = scmp.eq.s32.totalorder %s28, 3
      %p289 = por %p287, %p288
      %p291 = scmp.ne.s32.totalorder %s274, %s290
      %p292 = scmp.eq.s32.totalorder %s28, 0
      %p293 = por %p291, %p292
      %p294 = scmp.le.s32.totalorder 1, %s22
      %p295 = scmp.lt.s32.totalorder %s22, 5
      %p296 = pnand %p294, %p295
      %p297 = pneg %p296
      // Predicated region
      $region9: #{tpu_custom_call.1} parent=5 // pred_check
        _
      $region10: #{tpu_custom_call.1} parent=5 // pred_check_branch
        %299 = sbr.rel (%p296) target = $region12
      $region11: #{tpu_custom_call.1} parent=5 // pred_region
        %s300 = ssub.s32 %s22, 1
        // Predicated region
        $region13: #{tpu_custom_call.1} parent=11 // pred_check
          %p301 = pneg %p211
        $region14: #{tpu_custom_call.1} parent=11 // pred_check_branch
          %303 = sbr.rel (%p301) target = $region16
        $region15: #{tpu_custom_call.1} parent=11 // pred_region
          _
        $region16: #{tpu_custom_call.1} parent=11 // pred_fallthru
          _
        // Predicated region
        $region17: #{tpu_custom_call.1} parent=11 // pred_check
          %p304 = pneg %p232
        $region18: #{tpu_custom_call.1} parent=11 // pred_check_branch
          %306 = sbr.rel (%p304) target = $region20
        $region19: #{tpu_custom_call.1} parent=11 // pred_region
          _
        $region20: #{tpu_custom_call.1} parent=11 // pred_fallthru
          _
      $region12: #{tpu_custom_call.1} parent=5 // pred_fallthru
        _
      %p307 = scmp.lt.s32.totalorder %s22, 4
      // Predicated region
      $region21: #{tpu_custom_call.1} parent=5 // pred_check
        %p308 = pneg %p307
      $region22: #{tpu_custom_call.1} parent=5 // pred_check_branch
        %310 = sbr.rel (%p308) target = $region24
      $region23: #{tpu_custom_call.1} parent=5 // pred_region
        // Predicated region
        $region25: #{tpu_custom_call.1} parent=23 // pred_check
          %p311 = pneg %p54
        $region26: #{tpu_custom_call.1} parent=23 // pred_check_branch
          %313 = sbr.rel (%p311) target = $region28
        $region27: #{tpu_custom_call.1} parent=23 // pred_region
          %p314 = scmp.lt.s32.totalorder %s29, 1
          %s315 = scalar_select %p314, %s29, 1
          %s316 = smul.addr %s315, 8
          %s317 = scalar_lea.vmem %s0, %s316
        $region28: #{tpu_custom_call.1} parent=23 // pred_fallthru
          _
        // Predicated region
        $region29: #{tpu_custom_call.1} parent=23 // pred_check
          %p318 = pneg %p80
        $region30: #{tpu_custom_call.1} parent=23 // pred_check_branch
          %320 = sbr.rel (%p318) target = $region32
        $region31: #{tpu_custom_call.1} parent=23 // pred_region
          %p321 = scmp.lt.s32.totalorder %s29, 1
          %s322 = scalar_select %p321, %s29, 1
          %s323 = smul.addr %s322, 8
          %s324 = scalar_lea.vmem %s1, %s323
        $region32: #{tpu_custom_call.1} parent=23 // pred_fallthru
          _
        // Predicated region
        $region33: #{tpu_custom_call.1} parent=23 // pred_check
          %p325 = pneg %p106
        $region34: #{tpu_custom_call.1} parent=23 // pred_check_branch
          %327 = sbr.rel (%p325) target = $region36
        $region35: #{tpu_custom_call.1} parent=23 // pred_region
          %p328 = scmp.lt.s32.totalorder %s30, 1
          %s329 = scalar_select %p328, %s30, 1
          %s330 = smul.addr %s329, 4
          %s331 = smul.addr %s330, 8
          %s332 = scalar_lea.vmem %s2, %s331
        $region36: #{tpu_custom_call.1} parent=23 // pred_fallthru
          _
        // Predicated region
        $region37: #{tpu_custom_call.1} parent=23 // pred_check
          %p333 = pneg %p132
        $region38: #{tpu_custom_call.1} parent=23 // pred_check_branch
          %335 = sbr.rel (%p333) target = $region40
        $region39: #{tpu_custom_call.1} parent=23 // pred_region
          %p336 = scmp.lt.s32.totalorder %s30, 1
          %s337 = scalar_select %p336, %s30, 1
          %s338 = smul.addr %s337, 4
          %s339 = smul.addr %s338, 8
          %s340 = scalar_lea.vmem %s3, %s339
        $region40: #{tpu_custom_call.1} parent=23 // pred_fallthru
          _
        // Predicated region
        $region41: #{tpu_custom_call.1} parent=23 // pred_check
          %p341 = pneg %p158
        $region42: #{tpu_custom_call.1} parent=23 // pred_check_branch
          %343 = sbr.rel (%p341) target = $region44
        $region43: #{tpu_custom_call.1} parent=23 // pred_region
          %p344 = scmp.lt.s32.totalorder %s30, 1
          %s345 = scalar_select %p344, %s30, 1
          %s346 = smul.addr %s345, 4
          %s347 = smul.addr %s346, 8
          %s348 = scalar_lea.vmem %s4, %s347
        $region44: #{tpu_custom_call.1} parent=23 // pred_fallthru
          _
        // Predicated region
        $region45: #{tpu_custom_call.1} parent=23 // pred_check
          %p349 = pneg %p184
        $region46: #{tpu_custom_call.1} parent=23 // pred_check_branch
          %351 = sbr.rel (%p349) target = $region48
        $region47: #{tpu_custom_call.1} parent=23 // pred_region
          %p352 = scmp.lt.s32.totalorder %s30, 1
          %s353 = scalar_select %p352, %s30, 1
          %s354 = smul.addr %s353, 2
          %s355 = smul.addr %s354, 8
          %s356 = scalar_lea.vmem %s5, %s355
        $region48: #{tpu_custom_call.1} parent=23 // pred_fallthru
          _
      $region24: #{tpu_custom_call.1} parent=5 // pred_fallthru
        _
      %p357 = scmp.le.s32.totalorder 1, %s22
      %p358 = scmp.lt.s32.totalorder %s22, 5
      %p359 = pnand %p357, %p358
      %p360 = pneg %p359
      // Predicated region
      $region49: #{tpu_custom_call.1} parent=5 // pred_check
        _
      $region50: #{tpu_custom_call.1} parent=5 // pred_check_branch
        %362 = sbr.rel (%p359) target = $region52
      $region51: #{tpu_custom_call.1} parent=5 // pred_region
        %s363 = ssub.s32 %s22, 1
        %p364 = scmp.lt.s32.totalorder %s31, 1
        %s365 = scalar_select %p364, %s31, 1
        %s366 = smul.addr %s365, 8
        %s367 = scalar_lea.vmem %s0, %s366
        %p368 = pneg %p60
        %p369 = pneg %p57
        %p370 = scmp.lt.s32.totalorder %s31, 1
        %s371 = scalar_select %p370, %s31, 1
        %s372 = smul.addr %s371, 8
        %s373 = scalar_lea.vmem %s1, %s372
        %p374 = pneg %p86
        %p375 = pneg %p83
        %p376 = scmp.lt.s32.totalorder %s32, 1
        %s377 = scalar_select %p376, %s32, 1
        %s378 = smul.addr %s377, 4
        %s379 = smul.addr %s378, 8
        %s380 = scalar_lea.vmem %s2, %s379
        %p381 = pneg %p112
        %p382 = pneg %p109
        %p383 = scmp.lt.s32.totalorder %s32, 1
        %s384 = scalar_select %p383, %s32, 1
        %s385 = smul.addr %s384, 4
        %s386 = smul.addr %s385, 8
        %s387 = scalar_lea.vmem %s3, %s386
        %p388 = pneg %p138
        %p389 = pneg %p135
        %p390 = scmp.lt.s32.totalorder %s32, 1
        %s391 = scalar_select %p390, %s32, 1
        %s392 = smul.addr %s391, 4
        %s393 = smul.addr %s392, 8
        %s394 = scalar_lea.vmem %s4, %s393
        %p395 = pneg %p164
        %p396 = pneg %p161
        %p397 = scmp.lt.s32.totalorder %s32, 1
        %s398 = scalar_select %p397, %s32, 1
        %s399 = smul.addr %s398, 2
        %s400 = smul.addr %s399, 8
        %s401 = scalar_lea.vmem %s5, %s400
        %p402 = pneg %p190
        %p403 = pneg %p187
        %p404 = pneg %p211
        %p405 = pneg %p208
        %p406 = pneg %p232
        %p407 = pneg %p229
        %p408 = pneg %p258
        %p409 = pneg %p255
        %s410 = sand.u32 %s245, 1
        %s411 = scalar_lea.sflag [#allocation4], %s410
        %s412 = sand.u32 %s245, 1
        %s413 = smul.addr %s412, 8
        %s414 = scalar_lea.vmem [#allocation3], %s413
        %p415 = pneg %p286
        %p416 = pneg %p283
        %s417 = sand.u32 %s273, 1
        %s418 = scalar_lea.sflag [#allocation6], %s417
        %s419 = sand.u32 %s273, 1
        %s420 = smul.addr %s419, 8
        %s421 = scalar_lea.vmem [#allocation5], %s420
        %p422 = scmp.lt.s32.totalorder %s31, 1
        %s423 = scalar_select %p422, %s31, 1
        %s424 = smul.addr %s423, 8
        %s425 = scalar_lea.vmem %s0, %s424
        %p426 = scmp.lt.s32.totalorder %s31, 1
        %s427 = scalar_select %p426, %s31, 1
        %s428 = smul.addr %s427, 8
        %s429 = scalar_lea.vmem %s1, %s428
        %p430 = scmp.lt.s32.totalorder %s32, 1
        %s431 = scalar_select %p430, %s32, 1
        %s432 = smul.addr %s431, 4
        %s433 = smul.addr %s432, 8
        %s434 = scalar_lea.vmem %s2, %s433
        %p435 = scmp.lt.s32.totalorder %s32, 1
        %s436 = scalar_select %p435, %s32, 1
        %s437 = smul.addr %s436, 4
        %s438 = smul.addr %s437, 8
        %s439 = scalar_lea.vmem %s3, %s438
        %p440 = scmp.lt.s32.totalorder %s32, 1
        %s441 = scalar_select %p440, %s32, 1
        %s442 = smul.addr %s441, 4
        %s443 = smul.addr %s442, 8
        %s444 = scalar_lea.vmem %s4, %s443
        %p445 = scmp.lt.s32.totalorder %s32, 1
        %s446 = scalar_select %p445, %s32, 1
        %s447 = smul.addr %s446, 2
        %s448 = smul.addr %s447, 8
        %s449 = scalar_lea.vmem %s5, %s448
        %v450 = vld [vmem:[%s425] sm:$0xff]
        %v451 = vld [vmem:[%s429] sm:$0xff]
        %v452 = vld [vmem:[%s434] sm:$0xff]
        %v453 = vld [vmem:[%s434 + $0x8] sm:$0xff]
        %v454 = vld [vmem:[%s434 + $0x10] sm:$0xff]
        %v455 = vld [vmem:[%s434 + $0x18] sm:$0xff]
        %v456 = vld [vmem:[%s439] sm:$0xff]
        %v457 = vld [vmem:[%s439 + $0x8] sm:$0xff]
        %v458 = vld [vmem:[%s439 + $0x10] sm:$0xff]
        %v459 = vld [vmem:[%s439 + $0x18] sm:$0xff]
        %v460 = vld [vmem:[%s444] sm:$0xff]
        %v461 = vld [vmem:[%s444 + $0x8] sm:$0xff]
        %v462 = vld [vmem:[%s444 + $0x10] sm:$0xff]
        %v463 = vld [vmem:[%s444 + $0x18] sm:$0xff]
        %v464 = vld [vmem:[%s449] sm:$0xff]
        %v465 = vld [vmem:[%s449 + $0x8] sm:$0xff]
        %vm466 = vcmask 261120
        %v468 = vsel %vm466, %v450, 0
        %470 = vmatpush.msra.mxu0 0.0
        %471 = vmatpush.msra.mxu0 0.0
        %472 = vmatpush.msra.mxu0 0.0
        %473 = vmatpush.msra.mxu0 0.0
        %474 = vmatpush.msra.mxu0 0.0
        %475 = vmatpush.msra.mxu0 0.0
        %476 = vmatpush.msra.mxu0 0.0
        %477 = vmatpush.msra.mxu0 0.0
        %478 = vmatpush.msra.mxu0 0.0
        %479 = vmatpush.msra.mxu0 0.0
        %480 = vmatpush.msra.mxu0 0.0
        %481 = vmatpush.msra.mxu0 0.0
        %482 = vmatpush.msra.mxu0 %v455
        %483 = vmatpush.msra.mxu0 %v454
        %484 = vmatpush.msra.mxu0 %v453
        %485 = vmatpush.msra.mxu0 %v452
        %486 = vmatmul.f32.gmra.mxu0 %v468
        %v487 = vpop.f32.mrf.mxu0
        %v488 = vadd.f32 0.0, %v487
        %489 = vdwg.mxu0
        %490 = vmatpush.msra.mxu0 0.0
        %491 = vmatpush.msra.mxu0 0.0
        %492 = vmatpush.msra.mxu0 0.0
        %493 = vmatpush.msra.mxu0 0.0
        %494 = vmatpush.msra.mxu0 0.0
        %495 = vmatpush.msra.mxu0 0.0
        %496 = vmatpush.msra.mxu0 0.0
        %497 = vmatpush.msra.mxu0 0.0
        %498 = vmatpush.msra.mxu0 0.0
        %499 = vmatpush.msra.mxu0 0.0
        %500 = vmatpush.msra.mxu0 0.0
        %501 = vmatpush.msra.mxu0 0.0
        %502 = vmatpush.msra.mxu0 %v459
        %503 = vmatpush.msra.mxu0 %v458
        %504 = vmatpush.msra.mxu0 %v457
        %505 = vmatpush.msra.mxu0 %v456
        %506 = vmatmul.f32.gmra.mxu0 %v468
        %v507 = vpop.f32.mrf.mxu0
        %v508 = vadd.f32 0.0, %v507
        %509 = vdwg.mxu0
        %510 = vmatpush.msra.mxu0 0.0
        %511 = vmatpush.msra.mxu0 0.0
        %512 = vmatpush.msra.mxu0 0.0
        %513 = vmatpush.msra.mxu0 0.0
        %514 = vmatpush.msra.mxu0 0.0
        %515 = vmatpush.msra.mxu0 0.0
        %516 = vmatpush.msra.mxu0 0.0
        %517 = vmatpush.msra.mxu0 0.0
        %518 = vmatpush.msra.mxu0 0.0
        %519 = vmatpush.msra.mxu0 0.0
        %520 = vmatpush.msra.mxu0 0.0
        %521 = vmatpush.msra.mxu0 0.0
        %522 = vmatpush.msra.mxu0 %v463
        %523 = vmatpush.msra.mxu0 %v462
        %524 = vmatpush.msra.mxu0 %v461
        %525 = vmatpush.msra.mxu0 %v460
        %526 = vmatmul.f32.gmra.mxu0 %v468
        %v527 = vpop.f32.mrf.mxu0
        %v528 = vadd.f32 0.0, %v527
        %529 = vdwg.mxu0
        %vm530 = vcmask 130048
        %v532 = vsel %vm530, %v488, 0
        %v535 = vsel %vm530, %v508, 0
        %537 = vmatpush.xpose.msra.mxu0 0.0
        %538 = vmatpush.xpose.msra.mxu0 0.0
        %539 = vmatpush.xpose.msra.mxu0 0.0
        %540 = vmatpush.xpose.msra.mxu0 0.0
        %541 = vmatpush.xpose.msra.mxu0 0.0
        %542 = vmatpush.xpose.msra.mxu0 0.0
        %543 = vmatpush.xpose.msra.mxu0 0.0
        %544 = vmatpush.xpose.msra.mxu0 0.0
        %545 = vmatpush.xpose.msra.mxu0 0.0
        %546 = vmatpush.xpose.msra.mxu0 0.0
        %547 = vmatpush.xpose.msra.mxu0 0.0
        %548 = vmatpush.xpose.msra.mxu0 0.0
        %549 = vmatpush.xpose.msra.mxu0 0.0
        %550 = vmatpush.xpose.msra.mxu0 0.0
        %551 = vmatpush.xpose.msra.mxu0 0.0
        %552 = vmatpush.xpose.msra.mxu0 %v535
        %553 = vmatmul.f32.gmra.mxu0 %v532
        %v554 = vpop.f32.mrf.mxu0
        %v555 = vadd.f32 0.0, %v554
        %556 = vdwg.mxu0
        %vm557 = vcmp.eq.f32.partialorder %v451, 0.0
        %v558 = vsel %vm557, -1e+09, %v555
        %vm559 = vcmask 64512
        %v560 = vsel %vm559, %v558, -inf
        %561 = vmax.xlane.f32.xlu0 %v560
        %v562 = vpop.xlane.xlu0 %561
        %v563 = vsub.f32 %v558, %v562
        %v564 = vmul.f32 %v563, 1.442695
        %v565 = vpow.pop %v564
        %v566 = vsel %vm559, %v565, 0.0
        %567 = vadd.xlane.f32.xlu0 %v566
        %v568 = vpop.xlane.xlu0 %567
        %v569 = vrcp.pop %v568
        %v570 = vmul.f32 %v568, %v569
        %v571 = vsub.f32 1.0, %v570
        %v572 = vmul.f32 %v569, %v571
        %v573 = vadd.f32 %v569, %v572
        %vm574 = vweird.f32 %v568
        %vm575 = vweird.f32 %v569
        %vm576 = vmor %vm574, %vm575
        %v577 = vsel %vm576, %v569, %v573
        %v578 = vand.u32 2147483647, %v568
        %vm579 = vcmp.eq.f32.partialorder %v578, 8.507059e+37
        %v580 = vand.u32 %v568, 2147483648
        %v581 = vor.u32 1.1754944e-38, %v580
        %v582 = vsel %vm579, %v581, %v577
        %v583 = vmul.f32 %v565, %v582
        %584 = vst.msk [vmem:[%s421] sm:$0xff] %vm559, %v583
        %v586 = vsel %vm559, %v583, 0
        %588 = vmatpush.msra.mxu0 0.0
        %589 = vmatpush.msra.mxu0 0.0
        %590 = vmatpush.msra.mxu0 0.0
        %591 = vmatpush.msra.mxu0 0.0
        %592 = vmatpush.msra.mxu0 0.0
        %593 = vmatpush.msra.mxu0 0.0
        %594 = vmatpush.msra.mxu0 0.0
        %595 = vmatpush.msra.mxu0 0.0
        %596 = vmatpush.msra.mxu0 0.0
        %597 = vmatpush.msra.mxu0 0.0
        %598 = vmatpush.msra.mxu0 0.0
        %599 = vmatpush.msra.mxu0 0.0
        %600 = vmatpush.msra.mxu0 0.0
        %601 = vmatpush.msra.mxu0 0.0
        %602 = vmatpush.msra.mxu0 0.0
        %603 = vmatpush.msra.mxu0 %v528
        %604 = vmatmul.f32.gmra.mxu0 %v586
        %v605 = vpop.f32.mrf.mxu0
        %v606 = vadd.f32 0.0, %v605
        %607 = vdwg.mxu0
        %v609 = vsel %vm530, %v606, 0
        %611 = vmatpush.msra.mxu0 0.0
        %612 = vmatpush.msra.mxu0 0.0
        %613 = vmatpush.msra.mxu0 0.0
        %614 = vmatpush.msra.mxu0 0.0
        %615 = vmatpush.msra.mxu0 0.0
        %616 = vmatpush.msra.mxu0 0.0
        %617 = vmatpush.msra.mxu0 0.0
        %618 = vmatpush.msra.mxu0 0.0
        %619 = vmatpush.msra.mxu0 0.0
        %620 = vmatpush.msra.mxu0 0.0
        %621 = vmatpush.msra.mxu0 0.0
        %622 = vmatpush.msra.mxu0 0.0
        %623 = vmatpush.msra.mxu0 0.0
        %624 = vmatpush.msra.mxu0 0.0
        %625 = vmatpush.msra.mxu0 %v465
        %626 = vmatpush.msra.mxu0 %v464
        %627 = vmatmul.f32.gmra.mxu0 %v609
        %v628 = vpop.f32.mrf.mxu0
        %v629 = vadd.f32 0.0, %v628
        %630 = vdwg.mxu0
        %p631 = scmp.eq.s32.totalorder %s32, 0
        // Predicated region
        $region53: #{tpu_custom_call.1} parent=51 // pred_check
          %p632 = pneg %p631
        $region54: #{tpu_custom_call.1} parent=51 // pred_check_branch
          %634 = sbr.rel (%p632) target = $region56
        $region55: #{tpu_custom_call.1} parent=51 // pred_region
          %635 = vst.msk [vmem:[#allocation2] sm:$0xff] %vm466, %v629
        $region56: #{tpu_custom_call.1} parent=51 // pred_fallthru
          _
        %p636 = scmp.ne.s32.totalorder %s32, 0
        // Predicated region
        $region57: #{tpu_custom_call.1} parent=51 // pred_check
          %p637 = pneg %p636
        $region58: #{tpu_custom_call.1} parent=51 // pred_check_branch
          %639 = sbr.rel (%p637) target = $region60
        $region59: #{tpu_custom_call.1} parent=51 // pred_region
          %v640 = vld [vmem:[#allocation2] sm:$0xff]
          %v641 = vadd.f32 %v640, %v629
          %642 = vst.msk [vmem:[#allocation2] sm:$0xff] %vm466, %v641
        $region60: #{tpu_custom_call.1} parent=51 // pred_fallthru
          _
        %p643 = scmp.eq.s32.totalorder %s32, 1
        // Predicated region
        $region61: #{tpu_custom_call.1} parent=51 // pred_check
          %p644 = pneg %p643
        $region62: #{tpu_custom_call.1} parent=51 // pred_check_branch
          %646 = sbr.rel (%p644) target = $region64
        $region63: #{tpu_custom_call.1} parent=51 // pred_region
          %v647 = vld [vmem:[#allocation2] sm:$0xff]
          %v648 = vadd.f32 %v647, %v450
          %v649 = vsel %vm466, %v648, 0.0
          %650 = vadd.xlane.f32.xlu0 %v649
          %v651 = vpop.xlane.xlu0 %650
          %v652 = vrcp.pop 32.0
          %v653 = vmul.f32 32.0, %v652
          %v654 = vsub.f32 1.0, %v653
          %v655 = vmul.f32 %v652, %v654
          %v656 = vadd.f32 %v652, %v655
          %vm657 = vweird.f32 %v652
          %v658 = vsel %vm657, %v652, %v656
          %v659 = vmul.f32 %v651, %v658
          %v660 = vsub.f32 %v648, %v659
          %v661 = vmul.f32 %v660, %v660
          %v662 = vsel %vm466, %v661, 0.0
          %663 = vadd.xlane.f32.xlu0 %v662
          %v664 = vpop.xlane.xlu0 %663
          %v665 = vmul.f32 %v664, %v658
          %v666 = vadd.f32 %v665, 1e-06
          %v667 = vrsqrt.pop %v666
          %v668 = vmul.f32 %v667, %v666
          %v669 = vmul.f32 %v668, %v667
          %v670 = vmul.f32 0.5, %v669
          %v671 = vsub.f32 1.5, %v670
          %v672 = vmul.f32 %v667, %v671
          %vm673 = vweird.f32 %v666
          %vm674 = vweird.f32 %v667
          %vm675 = vmor %vm673, %vm674
          %v676 = vsel %vm675, %v667, %v672
          %v677 = vmul.f32 %v660, %v676
          %v678 = vld [vmem:[%s6] sm:$0x1]
          %v680 = vperm.slane %v678, 0
          %v682 = vmul.f32 %v677, %v680
          %v683 = vld [vmem:[%s7] sm:$0x1]
          %v685 = vperm.slane %v683, 0
          %v687 = vadd.f32 %v682, %v685
          %688 = vst.msk [vmem:[%s414] sm:$0xff] %vm466, %v687
        $region64: #{tpu_custom_call.1} parent=51 // pred_fallthru
          _
        %s689 = sand.u32 %s245, 1
        %s690 = scalar_lea.sflag [#allocation4], %s689
        %s691 = sand.u32 %s245, 1
        %s692 = smul.addr %s691, 8
        %s693 = scalar_lea.vmem [#allocation3], %s692
        %s694 = sand.u32 %s273, 1
        %s695 = scalar_lea.sflag [#allocation6], %s694
        %s696 = sand.u32 %s273, 1
        %s697 = smul.addr %s696, 8
        %s698 = scalar_lea.vmem [#allocation5], %s697
        // Predicated region
        $region65: #{tpu_custom_call.1} parent=51 // pred_check
          %p699 = pneg %p255
        $region66: #{tpu_custom_call.1} parent=51 // pred_check_branch
          %701 = sbr.rel (%p699) target = $region68
        $region67: #{tpu_custom_call.1} parent=51 // pred_region
          %703 = vsyncadd %s690, 0
          %s704 = smul.addr %s31, 8
          %s705 = scalar_lea.hbm %s8, %s704
          %s707 = sshll.u32 %s693, 4
          %s708 = int_to_ptr.vmem [resolvable:$true] %s707
          %s709 = sshll.u32 %s705, 4
          %s710 = int_to_ptr.hbm [resolvable:$true] %s709
          %712 = dma.vmem_to_hbm [thread:$0]  %s708, 128, %s710, %s690
        $region68: #{tpu_custom_call.1} parent=51 // pred_fallthru
          _
        // Predicated region
        $region69: #{tpu_custom_call.1} parent=51 // pred_check
          %p713 = pneg %p283
        $region70: #{tpu_custom_call.1} parent=51 // pred_check_branch
          %715 = sbr.rel (%p713) target = $region72
        $region71: #{tpu_custom_call.1} parent=51 // pred_region
          %717 = vsyncadd %s695, 0
          %s718 = smul.addr %s31, 2
          %s719 = sadd.s32 %s32, %s718
          %s720 = smul.addr %s719, 8
          %s721 = scalar_lea.hbm %s9, %s720
          %s723 = sshll.u32 %s698, 4
          %s724 = int_to_ptr.vmem [resolvable:$true] %s723
          %s725 = sshll.u32 %s721, 4
          %s726 = int_to_ptr.hbm [resolvable:$true] %s725
          %728 = dma.vmem_to_hbm [thread:$0]  %s724, 128, %s726, %s695
        $region72: #{tpu_custom_call.1} parent=51 // pred_fallthru
          _
      $region52: #{tpu_custom_call.1} parent=5 // pred_fallthru
        _
      %p729 = scmp.le.s32.totalorder 2, %s22
      // Predicated region
      $region73: #{tpu_custom_call.1} parent=5 // pred_check
        %p730 = pneg %p729
      $region74: #{tpu_custom_call.1} parent=5 // pred_check_branch
        %732 = sbr.rel (%p730) target = $region76
      $region75: #{tpu_custom_call.1} parent=5 // pred_region
        %s733 = ssub.s32 %s22, 2
        // Predicated region
        $region77: #{tpu_custom_call.1} parent=75 // pred_check
          %p734 = pneg %p261
        $region78: #{tpu_custom_call.1} parent=75 // pred_check_branch
          %736 = sbr.rel (%p734) target = $region80
        $region79: #{tpu_custom_call.1} parent=75 // pred_region
          %s737 = sand.u32 %s246, 1
          %s738 = scalar_lea.sflag [#allocation4], %s737
          %s739 = sand.u32 %s246, 1
          %s740 = smul.addr %s739, 8
          %s741 = scalar_lea.vmem [#allocation3], %s740
          %743 = dma.done %s738, 128
        $region80: #{tpu_custom_call.1} parent=75 // pred_fallthru
          _
        // Predicated region
        $region81: #{tpu_custom_call.1} parent=75 // pred_check
          %p744 = pneg %p289
        $region82: #{tpu_custom_call.1} parent=75 // pred_check_branch
          %746 = sbr.rel (%p744) target = $region84
        $region83: #{tpu_custom_call.1} parent=75 // pred_region
          %s747 = sand.u32 %s274, 1
          %s748 = scalar_lea.sflag [#allocation6], %s747
          %s749 = sand.u32 %s274, 1
          %s750 = smul.addr %s749, 8
          %s751 = scalar_lea.vmem [#allocation5], %s750
          %753 = dma.done %s748, 128
        $region84: #{tpu_custom_call.1} parent=75 // pred_fallthru
          _
      $region76: #{tpu_custom_call.1} parent=5 // pred_fallthru
        _
    $region6: #{tpu_custom_call.1} parent=1 // loop_footer
      %s26 = sadd.s32 1, %s22
    $region7: #{tpu_custom_call.1} parent=1 // loop_footer_branch
      %21 = sbr.rel target = $region3
    $region8: #{tpu_custom_call.1} parent=1 // loop_exit
      _
    %754 = vsyncpa [#allocation4], 1
    %s755 = scalar_lea.sflag [#allocation4], 1
    %756 = vsyncpa %s755, 1
    %757 = vsyncpa [#allocation6], 1
    %s758 = scalar_lea.sflag [#allocation6], 1
    %759 = vsyncpa %s758, 1

</llo_original>
